<compile_context>
chip_gen: v7x
topology: tpu7x:2x2x1
jax: 0.10.0
libtpu: 0.0.40
codegen_flags: <defaults>
</compile_context>

<pallas_src>
import jax
import jax.numpy as jnp
from jax.experimental import pallas as pl
from jax.experimental.pallas import tpu as pltpu

# ---- model dimensions --------------------------------------------------------
B = 16        # example batch
D = 128       # input feature dim
H = 128       # hidden dim
Z = 64        # latent dim
P = 8         # predictor output dim
P_PAD = 64    # pred padded to 64 lanes so latent|pred forms a full 128-lane chunk

TAIL_W = D + P_PAD              # 192: block-diagonal (dec2 | pred2) output width
OUT_W = D + 2 * Z + Z + P_PAD   # 128 + 128 + 64 + 64 = 384 (lane-dense, 3*128)
MAX_TB = 128                    # tile batch only beyond 128 rows


# ---- fused forward on VMEM-resident values ------------------------------------
def _forward(x, eps, w_enc1, w_heads, w_l1, w_tail, biases):
    """Bias rows (width 256):
         0: b_enc1[:H]
         1: b_mean[:Z] | b_log_var[Z:2Z]
         2: b_dec1[:H] | b_pred1[H:2H]
         3: b_dec2[:D] | b_pred2[D:D+P]  (rest zero)

    Weights are bf16 at rest; dots accumulate in f32 (preferred_element_type);
    all elementwise math (exp / sigmoid / relu / reparam) stays in f32.
    """
    b = biases  # [8, 256] f32

    def mm(a, w):
        return jnp.dot(a.astype(jnp.bfloat16), w, preferred_element_type=jnp.float32)

    # ---------------- encoder ----------------
    h = jnp.maximum(mm(x, w_enc1) + b[0:1, :H], 0.0)              # [TB, H]
    mlv = mm(h, w_heads) + b[1:2, :2 * Z]                         # [TB, 2Z] = mean|log_var
    mean = mlv[:, :Z]
    log_var = mlv[:, Z:]
    latent = mean + jnp.exp(0.5 * log_var) * eps                  # [TB, Z]

    # ---- decoder layer1 + predictor layer1 (fused, full-width 256-lane ReLU) ----
    dhph = jnp.maximum(mm(latent, w_l1) + b[2:3, :2 * H], 0.0)    # [TB, 2H]

    # ---- decoder layer2 + predictor layer2 as one block-diagonal K=256 matmul ----
    tail = mm(dhph, w_tail) + b[3:4, :TAIL_W]                     # [TB, 192] = dec_pre | pred
    out = jax.nn.sigmoid(tail[:, :D])                             # [TB, D]
    pred_pad = tail[:, D:]                                        # [TB, P_PAD] (cols >= P are 0)

    # one lane-dense slab: out | mean | log_var | latent | pred_pad -> [TB, 384]
    return jnp.concatenate([out, mlv, latent, pred_pad], axis=-1)


# ---- kernel --------------------------------------------------------------------
def _svae_kernel(x_ref, eps_ref, we_ref, wh_ref, wl1_ref, wt_ref, b_ref, out_ref):
    out_ref[...] = _forward(
        x_ref[...], eps_ref[...], we_ref[...], wh_ref[...], wl1_ref[...],
        wt_ref[...], b_ref[...],
    ).astype(out_ref.dtype)


# ---- specs / wrapper -----------------------------------------------------------
def _row_spec(tb, width):
    return pl.BlockSpec((tb, width), lambda i: (i, 0))


def _full_spec(shape):
    return pl.BlockSpec(shape, lambda i: (0, 0))


_W_SPECS = [
    _full_spec((D, H)),            # w_enc1
    _full_spec((H, 2 * Z)),        # w_heads  (mean | log_var)
    _full_spec((Z, 2 * H)),        # w_l1     (dec layer1 | pred layer1)
    _full_spec((2 * H, TAIL_W)),   # w_tail   block-diag [[w_dec2, 0], [0, w_pred2_pad]]
    _full_spec((8, 2 * H)),        # packed biases (f32)
]

_MACS_PER_ROW = D * H + H * 2 * Z + Z * 2 * H + 2 * H * TAIL_W


def supervised_vae_forward(x, eps, kernel_params):
    """Fused SupervisedVAE forward. Returns (out, pred, latent, mean, log_var)."""
    batch = x.shape[0]
    assert x.shape[1] == D and eps.shape == (batch, Z)

    tb = batch if batch <= MAX_TB else MAX_TB
    assert batch % tb == 0, "batch must be a multiple of 128 when batch > 128"
    n_tiles = batch // tb
    # Do not megacore-split tiny grids (duplicated weight DMA dominates on v7x).
    semantics = ("parallel",) if n_tiles >= 4 else ("arbitrary",)

    cost = pl.CostEstimate(
        flops=2 * batch * _MACS_PER_ROW,
        transcendentals=batch * (Z + D),                  # exp (reparam) + sigmoid
        bytes_accessed=(batch * D * 4                     # x
                        + batch * Z * 4                   # eps
                        + 2 * _MACS_PER_ROW               # bf16 weights
                        + 8 * 2 * H * 4                   # packed biases
                        + batch * OUT_W * 4),             # packed output slab
    )
    compiler_params = pltpu.CompilerParams(
        dimension_semantics=semantics,
        vmem_limit_bytes=4 * 1024 * 1024,
    )

    grid_spec = pltpu.PrefetchScalarGridSpec(
        num_scalar_prefetch=0,
        grid=(n_tiles,),
        in_specs=[_row_spec(tb, D), _row_spec(tb, Z)] + _W_SPECS,
        out_specs=_row_spec(tb, OUT_W),
    )
    slab = pl.pallas_call(
        _svae_kernel,
        out_shape=jax.ShapeDtypeStruct((batch, OUT_W), jnp.float32),
        grid_spec=grid_spec,
        compiler_params=compiler_params,
        cost_estimate=cost,
    )(x, eps, *kernel_params)

    out = slab[:, :D]
    mean = slab[:, D:D + Z]
    log_var = slab[:, D + Z:D + 2 * Z]
    latent = slab[:, D + 2 * Z:D + 3 * Z]
    pred = slab[:, D + 3 * Z:D + 3 * Z + P]
    return out, pred, latent, mean, log_var


# ---- parameter construction ----------------------------------------------------
def init_params(key):
    """Returns (kernel_params, raw_params).

    raw_params: the 7 per-layer (W, b) pairs in f32 (how a checkpoint would look).
    kernel_params: fused/padded weights cast to bf16 + one packed [8,256] bias array.
    """
    ks = jax.random.split(key, 7)
    scale = 0.05

    def lin(k, fan_in, fan_out):
        kw, kb = jax.random.split(k)
        w = scale * jax.random.normal(kw, (fan_in, fan_out), jnp.float32)
        b_ = scale * jax.random.normal(kb, (fan_out,), jnp.float32)
        return w, b_

    we1, be1 = lin(ks[0], D, H)   # encoder layer 1
    wmu, bmu = lin(ks[1], H, Z)   # encoder mean head
    wlv, blv = lin(ks[2], H, Z)   # encoder log_var head
    wd1, bd1 = lin(ks[3], Z, H)   # decoder layer 1
    wd2, bd2 = lin(ks[4], H, D)   # decoder layer 2
    wp1, bp1 = lin(ks[5], Z, H)   # predictor layer 1
    wp2, bp2 = lin(ks[6], H, P)   # predictor layer 2

    raw = (we1, be1, wmu, bmu, wlv, blv, wd1, bd1, wd2, bd2, wp1, bp1, wp2, bp2)

    # fuse heads / layer-1s; build the block-diagonal dec2|pred2 tail matmul
    w_heads = jnp.concatenate([wmu, wlv], axis=1)                     # [H, 2Z]
    w_l1 = jnp.concatenate([wd1, wp1], axis=1)                        # [Z, 2H]
    w_tail = jnp.zeros((2 * H, TAIL_W), jnp.float32)
    w_tail = w_tail.at[:H, :D].set(wd2)
    w_tail = w_tail.at[H:, D:D + P].set(wp2)                          # [2H, 192]

    biases = jnp.zeros((8, 2 * H), jnp.float32)
    biases = biases.at[0, :H].set(be1)
    biases = biases.at[1, :Z].set(bmu)
    biases = biases.at[1, Z:2 * Z].set(blv)
    biases = biases.at[2, :H].set(bd1)
    biases = biases.at[2, H:2 * H].set(bp1)
    biases = biases.at[3, :D].set(bd2)
    biases = biases.at[3, D:D + P].set(bp2)

    bf16 = jnp.bfloat16
    kernel_params = (we1.astype(bf16), w_heads.astype(bf16), w_l1.astype(bf16),
                     w_tail.astype(bf16), biases)
    return kernel_params, raw


# ---- pure-JAX reference ---------------------------------------------------------
def _reference(x, eps, raw):
    (we1, be1, wmu, bmu, wlv, blv, wd1, bd1, wd2, bd2, wp1, bp1, wp2, bp2) = raw
    q = lambda w: w.astype(jnp.bfloat16).astype(jnp.float32)   # weights-at-rest quantization
    h = jnp.maximum(x @ q(we1) + be1, 0.0)
    mean = h @ q(wmu) + bmu
    log_var = h @ q(wlv) + blv
    latent = mean + jnp.exp(0.5 * log_var) * eps
    dh = jnp.maximum(latent @ q(wd1) + bd1, 0.0)
    out = jax.nn.sigmoid(dh @ q(wd2) + bd2)
    ph = jnp.maximum(latent @ q(wp1) + bp1, 0.0)
    pred = ph @ q(wp2) + bp2
    return out, pred, latent, mean, log_var


if __name__ == "__main__":
    key = jax.random.PRNGKey(0)
    k_x, k_eps, k_par = jax.random.split(key, 3)

    x = jax.random.normal(k_x, (B, D), jnp.float32)
    eps = jax.random.normal(k_eps, (B, Z), jnp.float32)   # reparameterization noise
    kernel_params, raw_params = init_params(k_par)

    out, pred, latent, mean, log_var = supervised_vae_forward(x, eps, kernel_params)
    jax.block_until_ready((out, pred, latent, mean, log_var))

    # shape checks (match the PyTorch module's 5 outputs)
    assert out.shape == (B, D)
    assert pred.shape == (B, P)
    assert latent.shape == (B, Z)
    assert mean.shape == (B, Z)
    assert log_var.shape == (B, Z)

    # numerical checks against a pure-JAX reference using the same eps
    r_out, r_pred, r_latent, r_mean, r_logvar = _reference(x, eps, raw_params)
    tol = dict(rtol=2e-2, atol=2e-2)
    assert jnp.allclose(mean, r_mean, **tol)
    assert jnp.allclose(log_var, r_logvar, **tol)
    assert jnp.allclose(latent, r_latent, **tol)
    assert jnp.allclose(out, r_out, **tol)
    assert jnp.allclose(pred, r_pred, **tol)
    assert bool(jnp.all(jnp.isfinite(latent)))

    print("KERNEL_OK")
</pallas_src>

<mosaic_0001>
module attributes {stable_mosaic.version = 11 : i64} {
  func.func @_svae_kernel(%arg0: i32, %arg1: memref<16x128xf32, #tpu.memory_space<vmem>>, %arg2: memref<16x64xf32, #tpu.memory_space<vmem>>, %arg3: memref<128x128xbf16, #tpu.memory_space<vmem>>, %arg4: memref<128x128xbf16, #tpu.memory_space<vmem>>, %arg5: memref<64x256xbf16, #tpu.memory_space<vmem>>, %arg6: memref<256x192xbf16, #tpu.memory_space<vmem>>, %arg7: memref<8x256xf32, #tpu.memory_space<vmem>>, %arg8: memref<16x384xf32, #tpu.memory_space<vmem>>) attributes {dimension_semantics = [#tpu.dimension_semantics<arbitrary>], iteration_bounds = array<i64: 1>, scalar_prefetch = 0 : i64, scratch_operands = 0 : i64, tpu.core_type = #tpu.core_type<tc>, window_params = [{transform_indices = @transform_0, window_bounds = array<i64: 16, 128>}, {transform_indices = @transform_1, window_bounds = array<i64: 16, 64>}, {pipeline_mode = #tpu.pipeline_mode<synchronous>, transform_indices = @transform_2, window_bounds = array<i64: 128, 128>}, {pipeline_mode = #tpu.pipeline_mode<synchronous>, transform_indices = @transform_3, window_bounds = array<i64: 128, 128>}, {pipeline_mode = #tpu.pipeline_mode<synchronous>, transform_indices = @transform_4, window_bounds = array<i64: 64, 256>}, {pipeline_mode = #tpu.pipeline_mode<synchronous>, transform_indices = @transform_5, window_bounds = array<i64: 256, 192>}, {pipeline_mode = #tpu.pipeline_mode<synchronous>, transform_indices = @transform_6, window_bounds = array<i64: 8, 256>}, {transform_indices = @transform_7, window_bounds = array<i64: 16, 384>}]} {
    %c0 = arith.constant 0 : index
    %c0_0 = arith.constant 0 : index
    %0 = vector.load %arg1[%c0, %c0_0] : memref<16x128xf32, #tpu.memory_space<vmem>>, vector<16x128xf32>
    %c0_1 = arith.constant 0 : index
    %c0_2 = arith.constant 0 : index
    %1 = vector.load %arg2[%c0_1, %c0_2] : memref<16x64xf32, #tpu.memory_space<vmem>>, vector<16x64xf32>
    %c0_3 = arith.constant 0 : index
    %c0_4 = arith.constant 0 : index
    %2 = vector.load %arg3[%c0_3, %c0_4] : memref<128x128xbf16, #tpu.memory_space<vmem>>, vector<128x128xbf16>
    %c0_5 = arith.constant 0 : index
    %c0_6 = arith.constant 0 : index
    %3 = vector.load %arg4[%c0_5, %c0_6] : memref<128x128xbf16, #tpu.memory_space<vmem>>, vector<128x128xbf16>
    %c0_7 = arith.constant 0 : index
    %c0_8 = arith.constant 0 : index
    %4 = vector.load %arg5[%c0_7, %c0_8] : memref<64x256xbf16, #tpu.memory_space<vmem>>, vector<64x256xbf16>
    %c0_9 = arith.constant 0 : index
    %c0_10 = arith.constant 0 : index
    %5 = vector.load %arg6[%c0_9, %c0_10] : memref<256x192xbf16, #tpu.memory_space<vmem>>, vector<256x192xbf16>
    %c0_11 = arith.constant 0 : index
    %c0_12 = arith.constant 0 : index
    %6 = vector.load %arg7[%c0_11, %c0_12] : memref<8x256xf32, #tpu.memory_space<vmem>>, vector<8x256xf32>
    %7 = arith.truncf %0 : vector<16x128xf32> to vector<16x128xbf16>
    %cst = arith.constant dense<0.000000e+00> : vector<16x128xf32>
    %8 = tpu.matmul %7, %2, %cst {dimension_numbers = #tpu.dot_dimension_numbers<[1], [0], [0], [1], [0, 0, 1, 1], [], []>} : vector<16x128xbf16>, vector<128x128xbf16>, vector<16x128xf32> -> vector<16x128xf32>
    %9 = vector.extract_strided_slice %6 {offsets = [0, 0], sizes = [1, 128], strides = [1, 1]} : vector<8x256xf32> to vector<1x128xf32>
    %10 = vector.broadcast %9 : vector<1x128xf32> to vector<16x128xf32>
    %11 = arith.addf %8, %10 : vector<16x128xf32>
    %cst_13 = arith.constant 0.000000e+00 : f32
    %12 = vector.broadcast %cst_13 : f32 to vector<16x128xf32>
    %13 = arith.maximumf %11, %12 : vector<16x128xf32>
    %14 = arith.truncf %13 : vector<16x128xf32> to vector<16x128xbf16>
    %cst_14 = arith.constant dense<0.000000e+00> : vector<16x128xf32>
    %15 = tpu.matmul %14, %3, %cst_14 {dimension_numbers = #tpu.dot_dimension_numbers<[1], [0], [0], [1], [0, 0, 1, 1], [], []>} : vector<16x128xbf16>, vector<128x128xbf16>, vector<16x128xf32> -> vector<16x128xf32>
    %16 = vector.extract_strided_slice %6 {offsets = [1, 0], sizes = [1, 128], strides = [1, 1]} : vector<8x256xf32> to vector<1x128xf32>
    %17 = vector.broadcast %16 : vector<1x128xf32> to vector<16x128xf32>
    %18 = arith.addf %15, %17 : vector<16x128xf32>
    %19 = vector.extract_strided_slice %18 {offsets = [0, 0], sizes = [16, 64], strides = [1, 1]} : vector<16x128xf32> to vector<16x64xf32>
    %20 = vector.extract_strided_slice %18 {offsets = [0, 64], sizes = [16, 64], strides = [1, 1]} : vector<16x128xf32> to vector<16x64xf32>
    %cst_15 = arith.constant 5.000000e-01 : f32
    %21 = vector.broadcast %cst_15 : f32 to vector<16x64xf32>
    %22 = arith.mulf %21, %20 : vector<16x64xf32>
    %23 = math.exp %22 : vector<16x64xf32>
    %24 = arith.mulf %23, %1 : vector<16x64xf32>
    %25 = arith.addf %19, %24 : vector<16x64xf32>
    %26 = arith.truncf %25 : vector<16x64xf32> to vector<16x64xbf16>
    %cst_16 = arith.constant dense<0.000000e+00> : vector<16x256xf32>
    %27 = tpu.matmul %26, %4, %cst_16 {dimension_numbers = #tpu.dot_dimension_numbers<[1], [0], [0], [1], [0, 0, 1, 1], [], []>} : vector<16x64xbf16>, vector<64x256xbf16>, vector<16x256xf32> -> vector<16x256xf32>
    %28 = vector.extract_strided_slice %6 {offsets = [2, 0], sizes = [1, 256], strides = [1, 1]} : vector<8x256xf32> to vector<1x256xf32>
    %29 = vector.broadcast %28 : vector<1x256xf32> to vector<16x256xf32>
    %30 = arith.addf %27, %29 : vector<16x256xf32>
    %cst_17 = arith.constant 0.000000e+00 : f32
    %31 = vector.broadcast %cst_17 : f32 to vector<16x256xf32>
    %32 = arith.maximumf %30, %31 : vector<16x256xf32>
    %33 = arith.truncf %32 : vector<16x256xf32> to vector<16x256xbf16>
    %cst_18 = arith.constant dense<0.000000e+00> : vector<16x192xf32>
    %34 = tpu.matmul %33, %5, %cst_18 {dimension_numbers = #tpu.dot_dimension_numbers<[1], [0], [0], [1], [0, 0, 1, 1], [], []>} : vector<16x256xbf16>, vector<256x192xbf16>, vector<16x192xf32> -> vector<16x192xf32>
    %35 = vector.extract_strided_slice %6 {offsets = [3, 0], sizes = [1, 192], strides = [1, 1]} : vector<8x256xf32> to vector<1x192xf32>
    %36 = vector.broadcast %35 : vector<1x192xf32> to vector<16x192xf32>
    %37 = arith.addf %34, %36 : vector<16x192xf32>
    %38 = vector.extract_strided_slice %37 {offsets = [0, 0], sizes = [16, 128], strides = [1, 1]} : vector<16x192xf32> to vector<16x128xf32>
    %39 = arith.negf %38 : vector<16x128xf32>
    %40 = math.exp %39 : vector<16x128xf32>
    %cst_19 = arith.constant 1.000000e+00 : f32
    %41 = vector.broadcast %cst_19 : f32 to vector<16x128xf32>
    %42 = arith.addf %41, %40 : vector<16x128xf32>
    %43 = arith.divf %41, %42 : vector<16x128xf32>
    %44 = vector.extract_strided_slice %37 {offsets = [0, 128], sizes = [16, 64], strides = [1, 1]} : vector<16x192xf32> to vector<16x64xf32>
    %45 = tpu.concatenate %43, %18, %25, %44 in 1 : vector<16x128xf32>, vector<16x128xf32>, vector<16x64xf32>, vector<16x64xf32> -> vector<16x384xf32>
    %c0_20 = arith.constant 0 : index
    %c0_21 = arith.constant 0 : index
    %46 = vector.load %arg8[%c0_20, %c0_21] : memref<16x384xf32, #tpu.memory_space<vmem>>, vector<16x384xf32>
    tpu.vector_store %arg8[%c0_20, %c0_21], %45 {strides = array<i32>} : memref<16x384xf32, #tpu.memory_space<vmem>>, vector<16x384xf32>,
    return
  }
  func.func @transform_0(%arg0: i32) -> (i32, i32) {
    %c0_i32 = arith.constant 0 : i32
    %c0_i32_0 = arith.constant 0 : i32
    return %arg0, %c0_i32 : i32, i32
  }
  func.func @transform_1(%arg0: i32) -> (i32, i32) {
    %c0_i32 = arith.constant 0 : i32
    %c0_i32_0 = arith.constant 0 : i32
    return %arg0, %c0_i32 : i32, i32
  }
  func.func @transform_2(%arg0: i32) -> (i32, i32) {
    %c0_i32 = arith.constant 0 : i32
    %c0_i32_0 = arith.constant 0 : i32
    %c0_i32_1 = arith.constant 0 : i32
    return %c0_i32, %c0_i32_0 : i32, i32
  }
  func.func @transform_3(%arg0: i32) -> (i32, i32) {
    %c0_i32 = arith.constant 0 : i32
    %c0_i32_0 = arith.constant 0 : i32
    %c0_i32_1 = arith.constant 0 : i32
    return %c0_i32, %c0_i32_0 : i32, i32
  }
  func.func @transform_4(%arg0: i32) -> (i32, i32) {
    %c0_i32 = arith.constant 0 : i32
    %c0_i32_0 = arith.constant 0 : i32
    %c0_i32_1 = arith.constant 0 : i32
    return %c0_i32, %c0_i32_0 : i32, i32
  }
  func.func @transform_5(%arg0: i32) -> (i32, i32) {
    %c0_i32 = arith.constant 0 : i32
    %c0_i32_0 = arith.constant 0 : i32
    %c0_i32_1 = arith.constant 0 : i32
    return %c0_i32, %c0_i32_0 : i32, i32
  }
  func.func @transform_6(%arg0: i32) -> (i32, i32) {
    %c0_i32 = arith.constant 0 : i32
    %c0_i32_0 = arith.constant 0 : i32
    %c0_i32_1 = arith.constant 0 : i32
    return %c0_i32, %c0_i32_0 : i32, i32
  }
  func.func @transform_7(%arg0: i32) -> (i32, i32) {
    %c0_i32 = arith.constant 0 : i32
    %c0_i32_0 = arith.constant 0 : i32
    return %arg0, %c0_i32 : i32, i32
  }
}

</mosaic_0001>

<llo_original>
// kernel: tpu_custom_call.1
$region0: #{tpu_custom_call.1}
  #allocation0 [shape = 'u32[]', space=smem, size = 0x4, offset = 0x4, fixed_abs, tag = 'smem constant byte address 0x4 - core index']
  #allocation1 [shape = 'u32[144,128]{1,0:T(1,128)}', space=vmem, size = 0x12000, scoped, tag = 'internal scratch']
  %s0 = inlined_call_operand.vmem [shape: f32[16,128], index: 0, kind: input, shape index: {}]
  %s1 = inlined_call_operand.vmem [shape: f32[16,64], index: 1, kind: input, shape index: {}]
  %s2 = inlined_call_operand.vmem [shape: bf16[128,128], index: 2, kind: input, shape index: {}]
  %s3 = inlined_call_operand.vmem [shape: bf16[128,128], index: 3, kind: input, shape index: {}]
  %s4 = inlined_call_operand.vmem [shape: bf16[64,256], index: 4, kind: input, shape index: {}]
  %s5 = inlined_call_operand.vmem [shape: bf16[256,192], index: 5, kind: input, shape index: {}]
  %s6 = inlined_call_operand.vmem [shape: f32[8,256], index: 6, kind: input, shape index: {}]
  %s7 = inlined_call_operand.hbm [shape: f32[16,384], index: 7, kind: output, shape index: {}]
  %s8 = sld [smem:[#allocation0]]
  $region38: #{tpu_custom_call.1} parent=0
    _
  %s10 = ssub.s32 1, %s8
  %s11 = scalar_select 0, %s10, %s8
  $region1: #{tpu_custom_call.1} parent=0
    #allocation2 [shape = 'u8[24576]{0}', space=vmem, size = 0x6000, scoped, tag = 'output window, operand 0, single buffered']
    #allocation3 [shape = 's32[1]{0}', space=sflag, size = 0x4, scoped, tag = 'scoped memory for tpu_custom_call.1']
    %12 = vsyncpa [#allocation3], 0
    // Predicated region
    $region2: #{tpu_custom_call.1} parent=1 // pred_check
      _
    $region3: #{tpu_custom_call.1} parent=1 // pred_check_branch
      %14 = sbr.rel (0) target = $region5
    $region4: #{tpu_custom_call.1} parent=1 // pred_region
      _
    $region5: #{tpu_custom_call.1} parent=1 // pred_fallthru
      _
    // Predicated region
    $region6: #{tpu_custom_call.1} parent=1 // pred_check
      _
    $region7: #{tpu_custom_call.1} parent=1 // pred_check_branch
      %16 = sbr.rel (0) target = $region9
    $region8: #{tpu_custom_call.1} parent=1 // pred_region
      _
    $region9: #{tpu_custom_call.1} parent=1 // pred_fallthru
      _
    // Predicated region
    $region10: #{tpu_custom_call.1} parent=1 // pred_check
      _
    $region11: #{tpu_custom_call.1} parent=1 // pred_check_branch
      %18 = sbr.rel (0) target = $region13
    $region12: #{tpu_custom_call.1} parent=1 // pred_region
      _
    $region13: #{tpu_custom_call.1} parent=1 // pred_fallthru
      _
    // Predicated region
    $region14: #{tpu_custom_call.1} parent=1 // pred_check
      _
    $region15: #{tpu_custom_call.1} parent=1 // pred_check_branch
      %20 = sbr.rel (0) target = $region17
    $region16: #{tpu_custom_call.1} parent=1 // pred_region
      _
    $region17: #{tpu_custom_call.1} parent=1 // pred_fallthru
      _
    // Predicated region
    $region18: #{tpu_custom_call.1} parent=1 // pred_check
      _
    $region19: #{tpu_custom_call.1} parent=1 // pred_check_branch
      %22 = sbr.rel (0) target = $region21
    $region20: #{tpu_custom_call.1} parent=1 // pred_region
      _
    $region21: #{tpu_custom_call.1} parent=1 // pred_fallthru
      _
    // Predicated region
    $region22: #{tpu_custom_call.1} parent=1 // pred_check
      _
    $region23: #{tpu_custom_call.1} parent=1 // pred_check_branch
      %24 = sbr.rel (0) target = $region25
    $region24: #{tpu_custom_call.1} parent=1 // pred_region
      _
    $region25: #{tpu_custom_call.1} parent=1 // pred_fallthru
      _
    // Predicated region
    $region26: #{tpu_custom_call.1} parent=1 // pred_check
      _
    $region27: #{tpu_custom_call.1} parent=1 // pred_check_branch
      %26 = sbr.rel (0) target = $region29
    $region28: #{tpu_custom_call.1} parent=1 // pred_region
      _
    $region29: #{tpu_custom_call.1} parent=1 // pred_fallthru
      _
    %v28 = vld [vmem:[%s0] sm:$0xff]
    %v29 = vld [vmem:[%s0 + $0x8] sm:$0xff]
    %v30 = vld [vmem:[%s1] sm:$0xff]
    %v31 = vld [vmem:[%s1 + $0x8] sm:$0xff]
    %v32 = vld [vmem:[%s2] sm:$0xf]
    %v33 = vld [vmem:[%s2 + $0x4] sm:$0xf]
    %v34 = vld [vmem:[%s2 + $0x8] sm:$0xf]
    %v35 = vld [vmem:[%s2 + $0xc] sm:$0xf]
    %v36 = vld [vmem:[%s2 + $0x10] sm:$0xf]
    %v37 = vld [vmem:[%s2 + $0x14] sm:$0xf]
    %v38 = vld [vmem:[%s2 + $0x18] sm:$0xf]
    %v39 = vld [vmem:[%s2 + $0x1c] sm:$0xf]
    %v40 = vld [vmem:[%s2 + $0x20] sm:$0xf]
    %v41 = vld [vmem:[%s2 + $0x24] sm:$0xf]
    %v42 = vld [vmem:[%s2 + $0x28] sm:$0xf]
    %v43 = vld [vmem:[%s2 + $0x2c] sm:$0xf]
    %v44 = vld [vmem:[%s2 + $0x30] sm:$0xf]
    %v45 = vld [vmem:[%s2 + $0x34] sm:$0xf]
    %v46 = vld [vmem:[%s2 + $0x38] sm:$0xf]
    %v47 = vld [vmem:[%s2 + $0x3c] sm:$0xf]
    %v48 = vld [vmem:[%s3] sm:$0xf]
    %v49 = vld [vmem:[%s3 + $0x4] sm:$0xf]
    %v50 = vld [vmem:[%s3 + $0x8] sm:$0xf]
    %v51 = vld [vmem:[%s3 + $0xc] sm:$0xf]
    %v52 = vld [vmem:[%s3 + $0x10] sm:$0xf]
    %v53 = vld [vmem:[%s3 + $0x14] sm:$0xf]
    %v54 = vld [vmem:[%s3 + $0x18] sm:$0xf]
    %v55 = vld [vmem:[%s3 + $0x1c] sm:$0xf]
    %v56 = vld [vmem:[%s3 + $0x20] sm:$0xf]
    %v57 = vld [vmem:[%s3 + $0x24] sm:$0xf]
    %v58 = vld [vmem:[%s3 + $0x28] sm:$0xf]
    %v59 = vld [vmem:[%s3 + $0x2c] sm:$0xf]
    %v60 = vld [vmem:[%s3 + $0x30] sm:$0xf]
    %v61 = vld [vmem:[%s3 + $0x34] sm:$0xf]
    %v62 = vld [vmem:[%s3 + $0x38] sm:$0xf]
    %v63 = vld [vmem:[%s3 + $0x3c] sm:$0xf]
    %v64 = vld [vmem:[%s4] sm:$0xff]
    %v65 = vld [vmem:[%s4 + $0x8] sm:$0xff]
    %v66 = vld [vmem:[%s4 + $0x10] sm:$0xff]
    %v67 = vld [vmem:[%s4 + $0x18] sm:$0xff]
    %v68 = vld [vmem:[%s4 + $0x20] sm:$0xff]
    %v69 = vld [vmem:[%s4 + $0x28] sm:$0xff]
    %v70 = vld [vmem:[%s4 + $0x30] sm:$0xff]
    %v71 = vld [vmem:[%s4 + $0x38] sm:$0xff]
    %v72 = vld [vmem:[%s5] sm:$0xff]
    %v73 = vld [vmem:[%s5 + $0x8] sm:$0xff]
    %v74 = vld [vmem:[%s5 + $0x10] sm:$0xff]
    %v75 = vld [vmem:[%s5 + $0x18] sm:$0xff]
    %v76 = vld [vmem:[%s5 + $0x20] sm:$0xff]
    %v77 = vld [vmem:[%s5 + $0x28] sm:$0xff]
    %v78 = vld [vmem:[%s5 + $0x30] sm:$0xff]
    %v79 = vld [vmem:[%s5 + $0x38] sm:$0xff]
    %v80 = vld [vmem:[%s5 + $0x40] sm:$0xff]
    %v81 = vld [vmem:[%s5 + $0x48] sm:$0xff]
    %v82 = vld [vmem:[%s5 + $0x50] sm:$0xff]
    %v83 = vld [vmem:[%s5 + $0x58] sm:$0xff]
    %v84 = vld [vmem:[%s5 + $0x60] sm:$0xff]
    %v85 = vld [vmem:[%s5 + $0x68] sm:$0xff]
    %v86 = vld [vmem:[%s5 + $0x70] sm:$0xff]
    %v87 = vld [vmem:[%s5 + $0x78] sm:$0xff]
    %v88 = vld [vmem:[%s5 + $0x80] sm:$0xff]
    %v89 = vld [vmem:[%s5 + $0x88] sm:$0xff]
    %v90 = vld [vmem:[%s5 + $0x90] sm:$0xff]
    %v91 = vld [vmem:[%s5 + $0x98] sm:$0xff]
    %v92 = vld [vmem:[%s5 + $0xa0] sm:$0xff]
    %v93 = vld [vmem:[%s5 + $0xa8] sm:$0xff]
    %v94 = vld [vmem:[%s5 + $0xb0] sm:$0xff]
    %v95 = vld [vmem:[%s5 + $0xb8] sm:$0xff]
    %v96 = vld [vmem:[%s5 + $0xc0] sm:$0xff]
    %v97 = vld [vmem:[%s5 + $0xc8] sm:$0xff]
    %v98 = vld [vmem:[%s5 + $0xd0] sm:$0xff]
    %v99 = vld [vmem:[%s5 + $0xd8] sm:$0xff]
    %v100 = vld [vmem:[%s5 + $0xe0] sm:$0xff]
    %v101 = vld [vmem:[%s5 + $0xe8] sm:$0xff]
    %v102 = vld [vmem:[%s5 + $0xf0] sm:$0xff]
    %v103 = vld [vmem:[%s5 + $0xf8] sm:$0xff]
    %v104 = vld [vmem:[%s6] sm:$0xff]
    %v105 = vld [vmem:[%s6 + $0x8] sm:$0xff]
    %v106 = vpack.c.bf16 %v29, %v28
    %v107 = vlaneseq
    %v108 = vshrl.u32 %v107, 7
    %v109 = vsub.s32 0, %v108
    %v110 = vrot.slane %v104, %v109
    %v127 = vunpack.c.l.b16 %v32
    %v128 = vunpack.c.l.b16 %v33
    %v129 = vunpack.c.l.b16 %v34
    %v130 = vunpack.c.l.b16 %v35
    %v131 = vunpack.c.l.b16 %v36
    %v132 = vunpack.c.l.b16 %v37
    %v133 = vunpack.c.l.b16 %v38
    %v134 = vunpack.c.l.b16 %v39
    %v135 = vunpack.c.l.b16 %v40
    %v136 = vunpack.c.l.b16 %v41
    %v137 = vunpack.c.l.b16 %v42
    %v138 = vunpack.c.l.b16 %v43
    %v139 = vunpack.c.l.b16 %v44
    %v140 = vunpack.c.l.b16 %v45
    %v141 = vunpack.c.l.b16 %v46
    %v142 = vunpack.c.l.b16 %v47
    %v143 = vpack.c.b16 %v128, %v127
    %v144 = vpack.c.b16 %v130, %v129
    %v145 = vpack.c.b16 %v132, %v131
    %v146 = vpack.c.b16 %v134, %v133
    %v147 = vpack.c.b16 %v136, %v135
    %v148 = vpack.c.b16 %v138, %v137
    %v149 = vpack.c.b16 %v140, %v139
    %v150 = vpack.c.b16 %v142, %v141
    %159 = vmatprep.subr.bf16.mxu0 0
    %160 = vmatpush1.bf16.msra.mxu0 %v143
    %161 = vmatprep.subr.bf16.mxu0 0
    %162 = vmatpush1.bf16.msra.mxu0 %v144
    %163 = vmatprep.subr.bf16.mxu0 0
    %164 = vmatpush1.bf16.msra.mxu0 %v145
    %165 = vmatprep.subr.bf16.mxu0 0
    %166 = vmatpush1.bf16.msra.mxu0 %v146
    %167 = vmatprep.subr.bf16.mxu0 0
    %168 = vmatpush1.bf16.msra.mxu0 %v147
    %169 = vmatprep.subr.bf16.mxu0 0
    %170 = vmatpush1.bf16.msra.mxu0 %v148
    %171 = vmatprep.subr.bf16.mxu0 0
    %172 = vmatpush1.bf16.msra.mxu0 %v149
    %173 = vmatprep.subr.bf16.mxu0 0
    %174 = vmatpush1.bf16.msra.mxu0 %v150
    %175 = vmatprep.subr.bf16.mxu0 0
    %176 = vmatpush1.bf16.msra.mxu0 0
    %177 = vmatprep.subr.bf16.mxu0 0
    %178 = vmatpush1.bf16.msra.mxu0 0
    %179 = vmatprep.subr.bf16.mxu0 0
    %180 = vmatpush1.bf16.msra.mxu0 0
    %181 = vmatprep.subr.bf16.mxu0 0
    %182 = vmatpush1.bf16.msra.mxu0 0
    %183 = vmatprep.subr.bf16.mxu0 0
    %184 = vmatpush1.bf16.msra.mxu0 0
    %185 = vmatprep.subr.bf16.mxu0 0
    %186 = vmatpush1.bf16.msra.mxu0 0
    %187 = vmatprep.subr.bf16.mxu0 0
    %188 = vmatpush1.bf16.msra.mxu0 0
    %189 = vmatprep.subr.bf16.mxu0 0
    %190 = vmatpush1.bf16.msra.mxu0 0
    %191 = vmatprep.mubr.bf16.mxu0 0
    %192 = vmatmul.mubr.bf16.gmra.mrb[0].mxu0 %v106
    %v193 = vpop.f32.mrb[0].mxu0
    %v194 = vadd.f32 %v110, %v193
    %v195 = vpop.f32.mrb[0].mxu0
    %v196 = vpop.f32.mrb[0].mxu0
    %v197 = vadd.f32 %v110, %v196
    %v198 = vpop.f32.mrb[0].mxu0
    %199 = vdwg.mxu0
    %v200 = vmax.f32 %v194, 0.0
    %v201 = vmax.f32 %v197, 0.0
    %v202 = vpack.c.bf16 %v201, %v200
    %v203 = vlaneseq
    %v204 = vshrl.u32 %v203, 7
    %v205 = vsub.s32 1, %v204
    %v206 = vrot.slane %v104, %v205
    %v223 = vunpack.c.l.b16 %v48
    %v224 = vunpack.c.l.b16 %v49
    %v225 = vunpack.c.l.b16 %v50
    %v226 = vunpack.c.l.b16 %v51
    %v227 = vunpack.c.l.b16 %v52
    %v228 = vunpack.c.l.b16 %v53
    %v229 = vunpack.c.l.b16 %v54
    %v230 = vunpack.c.l.b16 %v55
    %v231 = vunpack.c.l.b16 %v56
    %v232 = vunpack.c.l.b16 %v57
    %v233 = vunpack.c.l.b16 %v58
    %v234 = vunpack.c.l.b16 %v59
    %v235 = vunpack.c.l.b16 %v60
    %v236 = vunpack.c.l.b16 %v61
    %v237 = vunpack.c.l.b16 %v62
    %v238 = vunpack.c.l.b16 %v63
    %v239 = vpack.c.b16 %v224, %v223
    %v240 = vpack.c.b16 %v226, %v225
    %v241 = vpack.c.b16 %v228, %v227
    %v242 = vpack.c.b16 %v230, %v229
    %v243 = vpack.c.b16 %v232, %v231
    %v244 = vpack.c.b16 %v234, %v233
    %v245 = vpack.c.b16 %v236, %v235
    %v246 = vpack.c.b16 %v238, %v237
    %255 = vmatprep.subr.bf16.mxu0 0
    %256 = vmatpush1.bf16.msra.mxu0 %v239
    %257 = vmatprep.subr.bf16.mxu0 0
    %258 = vmatpush1.bf16.msra.mxu0 %v240
    %259 = vmatprep.subr.bf16.mxu0 0
    %260 = vmatpush1.bf16.msra.mxu0 %v241
    %261 = vmatprep.subr.bf16.mxu0 0
    %262 = vmatpush1.bf16.msra.mxu0 %v242
    %263 = vmatprep.subr.bf16.mxu0 0
    %264 = vmatpush1.bf16.msra.mxu0 %v243
    %265 = vmatprep.subr.bf16.mxu0 0
    %266 = vmatpush1.bf16.msra.mxu0 %v244
    %267 = vmatprep.subr.bf16.mxu0 0
    %268 = vmatpush1.bf16.msra.mxu0 %v245
    %269 = vmatprep.subr.bf16.mxu0 0
    %270 = vmatpush1.bf16.msra.mxu0 %v246
    %271 = vmatprep.subr.bf16.mxu0 0
    %272 = vmatpush1.bf16.msra.mxu0 0
    %273 = vmatprep.subr.bf16.mxu0 0
    %274 = vmatpush1.bf16.msra.mxu0 0
    %275 = vmatprep.subr.bf16.mxu0 0
    %276 = vmatpush1.bf16.msra.mxu0 0
    %277 = vmatprep.subr.bf16.mxu0 0
    %278 = vmatpush1.bf16.msra.mxu0 0
    %279 = vmatprep.subr.bf16.mxu0 0
    %280 = vmatpush1.bf16.msra.mxu0 0
    %281 = vmatprep.subr.bf16.mxu0 0
    %282 = vmatpush1.bf16.msra.mxu0 0
    %283 = vmatprep.subr.bf16.mxu0 0
    %284 = vmatpush1.bf16.msra.mxu0 0
    %285 = vmatprep.subr.bf16.mxu0 0
    %286 = vmatpush1.bf16.msra.mxu0 0
    %287 = vmatprep.mubr.bf16.mxu0 0
    %288 = vmatmul.mubr.bf16.gmra.mrb[0].mxu0 %v202
    %v289 = vpop.f32.mrb[0].mxu0
    %v290 = vadd.f32 %v206, %v289
    %v291 = vpop.f32.mrb[0].mxu0
    %v292 = vpop.f32.mrb[0].mxu0
    %v293 = vadd.f32 %v206, %v292
    %v294 = vpop.f32.mrb[0].mxu0
    %295 = vdwg.mxu0
    %v296 = vmul.f32 %v290, 0.5
    %v297 = vmul.f32 %v293, 0.5
    %v298 = vmul.f32 %v296, 1.442695
    %v299 = vpow.pop %v298
    %v300 = vmul.f32 %v297, 1.442695
    %v301 = vpow.pop %v300
    %304 = vrot.lane.b32.xlu0 %v30, 64
    %v305 = vpop.permute.xlu0 %304
    %306 = vrot.lane.b32.xlu0 %v31, 64
    %v307 = vpop.permute.xlu0 %306
    %v310 = vmul.f32 %v299, %v305
    %v311 = vmul.f32 %v301, %v307
    %314 = vrot.lane.b32.xlu0 %v310, 64
    %v315 = vpop.permute.xlu0 %314
    %316 = vrot.lane.b32.xlu0 %v311, 64
    %v317 = vpop.permute.xlu0 %316
    %v320 = vadd.f32 %v290, %v315
    %v321 = vadd.f32 %v293, %v317
    %v322 = vpack.c.bf16 %v321, %v320
    %v323 = vlaneseq
    %v324 = vshrl.u32 %v323, 7
    %v325 = vsub.s32 2, %v324
    %v326 = vrot.slane %v104, %v325
    %v327 = vlaneseq
    %v328 = vshrl.u32 %v327, 7
    %v329 = vsub.s32 2, %v328
    %v330 = vrot.slane %v105, %v329
    %v339 = vunpack.c.l.b16 %v64
    %v340 = vunpack.c.h.b16 %v64
    %v341 = vunpack.c.l.b16 %v65
    %v342 = vunpack.c.h.b16 %v65
    %v343 = vunpack.c.l.b16 %v66
    %v344 = vunpack.c.h.b16 %v66
    %v345 = vunpack.c.l.b16 %v67
    %v346 = vunpack.c.h.b16 %v67
    %v347 = vunpack.c.l.b16 %v68
    %v348 = vunpack.c.h.b16 %v68
    %v349 = vunpack.c.l.b16 %v69
    %v350 = vunpack.c.h.b16 %v69
    %v351 = vunpack.c.l.b16 %v70
    %v352 = vunpack.c.h.b16 %v70
    %v353 = vunpack.c.l.b16 %v71
    %v354 = vunpack.c.h.b16 %v71
    %v355 = vpack.c.b16 %v341, %v339
    %v356 = vpack.c.b16 %v342, %v340
    %v357 = vpack.c.b16 %v345, %v343
    %v358 = vpack.c.b16 %v346, %v344
    %v359 = vpack.c.b16 %v349, %v347
    %v360 = vpack.c.b16 %v350, %v348
    %v361 = vpack.c.b16 %v353, %v351
    %v362 = vpack.c.b16 %v354, %v352
    %vm371 = vcmask 523264
    %v373 = vsel %vm371, %v322, 0
    %375 = vmatprep.subr.bf16.mxu0 %v356
    %376 = vmatpush1.bf16.msra.mxu0 %v355
    %377 = vmatprep.subr.bf16.mxu0 %v358
    %378 = vmatpush1.bf16.msra.mxu0 %v357
    %379 = vmatprep.subr.bf16.mxu0 %v360
    %380 = vmatpush1.bf16.msra.mxu0 %v359
    %381 = vmatprep.subr.bf16.mxu0 %v362
    %382 = vmatpush1.bf16.msra.mxu0 %v361
    %383 = vmatprep.subr.bf16.mxu0 0
    %384 = vmatpush1.bf16.msra.mxu0 0
    %385 = vmatprep.subr.bf16.mxu0 0
    %386 = vmatpush1.bf16.msra.mxu0 0
    %387 = vmatprep.subr.bf16.mxu0 0
    %388 = vmatpush1.bf16.msra.mxu0 0
    %389 = vmatprep.subr.bf16.mxu0 0
    %390 = vmatpush1.bf16.msra.mxu0 0
    %391 = vmatprep.subr.bf16.mxu0 0
    %392 = vmatpush1.bf16.msra.mxu0 0
    %393 = vmatprep.subr.bf16.mxu0 0
    %394 = vmatpush1.bf16.msra.mxu0 0
    %395 = vmatprep.subr.bf16.mxu0 0
    %396 = vmatpush1.bf16.msra.mxu0 0
    %397 = vmatprep.subr.bf16.mxu0 0
    %398 = vmatpush1.bf16.msra.mxu0 0
    %399 = vmatprep.subr.bf16.mxu0 0
    %400 = vmatpush1.bf16.msra.mxu0 0
    %401 = vmatprep.subr.bf16.mxu0 0
    %402 = vmatpush1.bf16.msra.mxu0 0
    %403 = vmatprep.subr.bf16.mxu0 0
    %404 = vmatpush1.bf16.msra.mxu0 0
    %405 = vmatprep.subr.bf16.mxu0 0
    %406 = vmatpush1.bf16.msra.mxu0 0
    %407 = vmatprep.mubr.bf16.mxu0 0
    %408 = vmatmul.mubr.bf16.gmra.mrb[0].mxu0 %v373
    %v409 = vpop.f32.mrb[0].mxu0
    %v410 = vadd.f32 %v326, %v409
    %v411 = vpop.f32.mrb[0].mxu0
    %v412 = vadd.f32 %v330, %v411
    %v413 = vpop.f32.mrb[0].mxu0
    %v414 = vadd.f32 %v326, %v413
    %v415 = vpop.f32.mrb[0].mxu0
    %v416 = vadd.f32 %v330, %v415
    %417 = vdwg.mxu0
    %v418 = vmax.f32 %v410, 0.0
    %v419 = vmax.f32 %v412, 0.0
    %v420 = vmax.f32 %v414, 0.0
    %v421 = vmax.f32 %v416, 0.0
    %v422 = vpack.c.bf16 %v420, %v418
    %v423 = vpack.c.bf16 %v421, %v419
    %v424 = vlaneseq
    %v425 = vshrl.u32 %v424, 7
    %v426 = vsub.s32 3, %v425
    %v427 = vrot.slane %v104, %v426
    %v428 = vlaneseq
    %v429 = vshrl.u32 %v428, 7
    %v430 = vsub.s32 3, %v429
    %v431 = vrot.slane %v105, %v430
    %v464 = vunpack.c.l.b16 %v72
    %v465 = vunpack.c.h.b16 %v72
    %v466 = vunpack.c.l.b16 %v73
    %v467 = vunpack.c.h.b16 %v73
    %v468 = vunpack.c.l.b16 %v74
    %v469 = vunpack.c.h.b16 %v74
    %v470 = vunpack.c.l.b16 %v75
    %v471 = vunpack.c.h.b16 %v75
    %v472 = vunpack.c.l.b16 %v76
    %v473 = vunpack.c.h.b16 %v76
    %v474 = vunpack.c.l.b16 %v77
    %v475 = vunpack.c.h.b16 %v77
    %v476 = vunpack.c.l.b16 %v78
    %v477 = vunpack.c.h.b16 %v78
    %v478 = vunpack.c.l.b16 %v79
    %v479 = vunpack.c.h.b16 %v79
    %v480 = vunpack.c.l.b16 %v80
    %v481 = vunpack.c.h.b16 %v80
    %v482 = vunpack.c.l.b16 %v81
    %v483 = vunpack.c.h.b16 %v81
    %v484 = vunpack.c.l.b16 %v82
    %v485 = vunpack.c.h.b16 %v82
    %v486 = vunpack.c.l.b16 %v83
    %v487 = vunpack.c.h.b16 %v83
    %v488 = vunpack.c.l.b16 %v84
    %v489 = vunpack.c.h.b16 %v84
    %v490 = vunpack.c.l.b16 %v85
    %v491 = vunpack.c.h.b16 %v85
    %v492 = vunpack.c.l.b16 %v86
    %v493 = vunpack.c.h.b16 %v86
    %v494 = vunpack.c.l.b16 %v87
    %v495 = vunpack.c.h.b16 %v87
    %v496 = vunpack.c.l.b16 %v88
    %v497 = vunpack.c.h.b16 %v88
    %v498 = vunpack.c.l.b16 %v89
    %v499 = vunpack.c.h.b16 %v89
    %v500 = vunpack.c.l.b16 %v90
    %v501 = vunpack.c.h.b16 %v90
    %v502 = vunpack.c.l.b16 %v91
    %v503 = vunpack.c.h.b16 %v91
    %v504 = vunpack.c.l.b16 %v92
    %v505 = vunpack.c.h.b16 %v92
    %v506 = vunpack.c.l.b16 %v93
    %v507 = vunpack.c.h.b16 %v93
    %v508 = vunpack.c.l.b16 %v94
    %v509 = vunpack.c.h.b16 %v94
    %v510 = vunpack.c.l.b16 %v95
    %v511 = vunpack.c.h.b16 %v95
    %v512 = vunpack.c.l.b16 %v96
    %v513 = vunpack.c.h.b16 %v96
    %v514 = vunpack.c.l.b16 %v97
    %v515 = vunpack.c.h.b16 %v97
    %v516 = vunpack.c.l.b16 %v98
    %v517 = vunpack.c.h.b16 %v98
    %v518 = vunpack.c.l.b16 %v99
    %v519 = vunpack.c.h.b16 %v99
    %v520 = vunpack.c.l.b16 %v100
    %v521 = vunpack.c.h.b16 %v100
    %v522 = vunpack.c.l.b16 %v101
    %v523 = vunpack.c.h.b16 %v101
    %v524 = vunpack.c.l.b16 %v102
    %v525 = vunpack.c.h.b16 %v102
    %v526 = vunpack.c.l.b16 %v103
    %v527 = vunpack.c.h.b16 %v103
    %v528 = vpack.c.b16 %v466, %v464
    %v529 = vpack.c.b16 %v467, %v465
    %v530 = vpack.c.b16 %v470, %v468
    %v531 = vpack.c.b16 %v471, %v469
    %v532 = vpack.c.b16 %v474, %v472
    %v533 = vpack.c.b16 %v475, %v473
    %v534 = vpack.c.b16 %v478, %v476
    %v535 = vpack.c.b16 %v479, %v477
    %v536 = vpack.c.b16 %v482, %v480
    %v537 = vpack.c.b16 %v483, %v481
    %v538 = vpack.c.b16 %v486, %v484
    %v539 = vpack.c.b16 %v487, %v485
    %v540 = vpack.c.b16 %v490, %v488
    %v541 = vpack.c.b16 %v491, %v489
    %v542 = vpack.c.b16 %v494, %v492
    %v543 = vpack.c.b16 %v495, %v493
    %v544 = vpack.c.b16 %v498, %v496
    %v545 = vpack.c.b16 %v499, %v497
    %v546 = vpack.c.b16 %v502, %v500
    %v547 = vpack.c.b16 %v503, %v501
    %v548 = vpack.c.b16 %v506, %v504
    %v549 = vpack.c.b16 %v507, %v505
    %v550 = vpack.c.b16 %v510, %v508
    %v551 = vpack.c.b16 %v511, %v509
    %v552 = vpack.c.b16 %v514, %v512
    %v553 = vpack.c.b16 %v515, %v513
    %v554 = vpack.c.b16 %v518, %v516
    %v555 = vpack.c.b16 %v519, %v517
    %v556 = vpack.c.b16 %v522, %v520
    %v557 = vpack.c.b16 %v523, %v521
    %v558 = vpack.c.b16 %v526, %v524
    %v559 = vpack.c.b16 %v527, %v525
    %592 = vmatprep.subr.bf16.mxu0 %v529
    %593 = vmatpush1.bf16.msra.mxu0 %v528
    %594 = vmatprep.subr.bf16.mxu0 %v531
    %595 = vmatpush1.bf16.msra.mxu0 %v530
    %596 = vmatprep.subr.bf16.mxu0 %v533
    %597 = vmatpush1.bf16.msra.mxu0 %v532
    %598 = vmatprep.subr.bf16.mxu0 %v535
    %599 = vmatpush1.bf16.msra.mxu0 %v534
    %600 = vmatprep.subr.bf16.mxu0 %v537
    %601 = vmatpush1.bf16.msra.mxu0 %v536
    %602 = vmatprep.subr.bf16.mxu0 %v539
    %603 = vmatpush1.bf16.msra.mxu0 %v538
    %604 = vmatprep.subr.bf16.mxu0 %v541
    %605 = vmatpush1.bf16.msra.mxu0 %v540
    %606 = vmatprep.subr.bf16.mxu0 %v543
    %607 = vmatpush1.bf16.msra.mxu0 %v542
    %608 = vmatprep.subr.bf16.mxu0 %v545
    %609 = vmatpush1.bf16.msra.mxu0 %v544
    %610 = vmatprep.subr.bf16.mxu0 %v547
    %611 = vmatpush1.bf16.msra.mxu0 %v546
    %612 = vmatprep.subr.bf16.mxu0 %v549
    %613 = vmatpush1.bf16.msra.mxu0 %v548
    %614 = vmatprep.subr.bf16.mxu0 %v551
    %615 = vmatpush1.bf16.msra.mxu0 %v550
    %616 = vmatprep.subr.bf16.mxu0 %v553
    %617 = vmatpush1.bf16.msra.mxu0 %v552
    %618 = vmatprep.subr.bf16.mxu0 %v555
    %619 = vmatpush1.bf16.msra.mxu0 %v554
    %620 = vmatprep.subr.bf16.mxu0 %v557
    %621 = vmatpush1.bf16.msra.mxu0 %v556
    %622 = vmatprep.subr.bf16.mxu0 %v559
    %623 = vmatpush1.bf16.msra.mxu0 %v558
    %624 = vmatprep.mubr.bf16.mxu0 %v423
    %625 = vmatmul.mubr.bf16.gmra.mrb[0].mxu0 %v422
    %v626 = vpop.f32.mrb[0].mxu0
    %v627 = vadd.f32 %v427, %v626
    %v628 = vpop.f32.mrb[0].mxu0
    %v629 = vadd.f32 %v431, %v628
    %v630 = vpop.f32.mrb[0].mxu0
    %v631 = vadd.f32 %v427, %v630
    %v632 = vpop.f32.mrb[0].mxu0
    %v633 = vadd.f32 %v431, %v632
    %634 = vdwg.mxu0
    %v635 = vxor.u32 %v627, 2147483648
    %v636 = vxor.u32 %v631, 2147483648
    %v637 = vmul.f32 %v635, 1.442695
    %v638 = vpow.pop %v637
    %v639 = vmul.f32 %v636, 1.442695
    %v640 = vpow.pop %v639
    %v641 = vadd.f32 %v638, 1.0
    %v642 = vadd.f32 %v640, 1.0
    %v643 = vrcp.pop %v641
    %v644 = vmul.f32 1.0, %v643
    %v645 = vrcp.pop %v642
    %v646 = vmul.f32 1.0, %v645
    %649 = vrot.lane.b32.xlu0 %v629, 64
    %v650 = vpop.permute.xlu0 %649
    %651 = vrot.lane.b32.xlu0 %v633, 64
    %v652 = vpop.permute.xlu0 %651
    %v655 = vsel %vm371, %v320, %v650
    %v656 = vsel %vm371, %v321, %v652
    %657 = vst [vmem:[#allocation2] sm:$0xff] %v644
    %658 = vst [vmem:[#allocation2 + $0x8] sm:$0xff] %v290
    %659 = vst [vmem:[#allocation2 + $0x10] sm:$0xff] %v655
    %660 = vst [vmem:[#allocation2 + $0x18] sm:$0xff] %v646
    %661 = vst [vmem:[#allocation2 + $0x20] sm:$0xff] %v293
    %662 = vst [vmem:[#allocation2 + $0x28] sm:$0xff] %v656
    // Predicated region
    $region30: #{tpu_custom_call.1} parent=1 // pred_check
      _
    $region31: #{tpu_custom_call.1} parent=1 // pred_check_branch
      %664 = sbr.rel (0) target = $region33
    $region32: #{tpu_custom_call.1} parent=1 // pred_region
      %s666 = ssub.s32 768, 768
      %667 = vsyncadd [#allocation3], %s666
      %s668 = sshll.u32 [#allocation2], 4
      %s669 = int_to_ptr.vmem [resolvable:$true] %s668
      %674 = dma.vmem_to_hbm [thread:$0]  %s669, 768, %s7, [#allocation3], 384, 384, 24
    $region33: #{tpu_custom_call.1} parent=1 // pred_fallthru
      _
    // Predicated region
    $region34: #{tpu_custom_call.1} parent=1 // pred_check
      _
    $region35: #{tpu_custom_call.1} parent=1 // pred_check_branch
      %676 = sbr.rel (0) target = $region37
    $region36: #{tpu_custom_call.1} parent=1 // pred_region
      %677 = dma.done [#allocation3], 768
    $region37: #{tpu_custom_call.1} parent=1 // pred_fallthru
      _
    %678 = vsyncpa [#allocation3], 1

</llo_original>
